<compile_context>
chip_gen: v7x
topology: tpu7x:2x2x1
jax: 0.10.0
libtpu: 0.0.40
codegen_flags: <defaults>
</compile_context>

<pallas_src>
import jax
import jax.numpy as jnp
from jax.experimental import pallas as pl
from jax.experimental.pallas import tpu as pltpu

INPUT_SIZE = 22
HIDDEN_1 = 40
HIDDEN_2 = 18
OUTPUT_SIZE = 6
BIAS_ROWS = 8        # packed-bias tile: (8, 128) f32  (rows 0/1/2 = b1/b2/b3)
BIAS_COLS = 128


def _round_up(n, m):
    return ((n + m - 1) // m) * m


def mlp_kernel(x_ref, w1_ref, w2_ref, w3_ref, b_ref, o_ref):
    # In-kernel f32->bf16 cast of the activations (free VPU work, halves the
    # input HBM traffic vs. a separate wrapper cast).
    x_bf = x_ref[...].astype(jnp.bfloat16)

    # fc1 + ReLU  (bf16 matmul, f32 accumulate; bias/activation in f32)
    h1 = jnp.dot(x_bf, w1_ref[...], preferred_element_type=jnp.float32)
    h1 = jnp.maximum(h1 + b_ref[0:1, :HIDDEN_1], 0.0)

    # fc2 + ReLU
    h2 = jnp.dot(h1.astype(jnp.bfloat16), w2_ref[...],
                 preferred_element_type=jnp.float32)
    h2 = jnp.maximum(h2 + b_ref[1:2, :HIDDEN_2], 0.0)

    # fc3 + Sigmoid (numerically-stable tanh form; tanh runs on the EUP)
    h3 = jnp.dot(h2.astype(jnp.bfloat16), w3_ref[...],
                 preferred_element_type=jnp.float32)
    h3 = h3 + b_ref[2:3, :OUTPUT_SIZE]
    o_ref[...] = (0.5 * (jnp.tanh(0.5 * h3) + 1.0)).astype(o_ref.dtype)


def mlp_forward(x, params, tile_b=2048):
    """x: [batch, INPUT_SIZE] f32. params: f32 weights [in,out] + biases [1,out]."""
    w1, b1, w2, b2, w3, b3 = params
    batch = x.shape[0]

    # Pad only to a multiple of 8 (sublane constraint), never to a full tile.
    padded_batch = _round_up(batch, 8)
    if padded_batch != batch:
        x = jnp.pad(x, ((0, padded_batch - batch), (0, 0)))

    # Pick the batch tile: big (amortizes ~0.35us/step overhead), but keep
    # >= 2 grid steps for large batches so both v7x TensorCores get work.
    if padded_batch >= 2048:
        max_tile = _round_up(pl.cdiv(padded_batch, 2), 8)
    else:
        max_tile = padded_batch
    tb = min(tile_b, max_tile)
    tb = max(8, (tb // 8) * 8)
    grid = (pl.cdiv(padded_batch, tb),)

    # bf16 weights for the MXU path (tiny, one-time casts).
    w1_bf = w1.astype(jnp.bfloat16)
    w2_bf = w2.astype(jnp.bfloat16)
    w3_bf = w3.astype(jnp.bfloat16)

    # Pack the three biases (f32) into one (8, 128) resident tile.
    b_pack = jnp.zeros((BIAS_ROWS, BIAS_COLS), jnp.float32)
    b_pack = b_pack.at[0, :HIDDEN_1].set(b1.reshape(-1))
    b_pack = b_pack.at[1, :HIDDEN_2].set(b2.reshape(-1))
    b_pack = b_pack.at[2, :OUTPUT_SIZE].set(b3.reshape(-1))

    out_padded = pl.pallas_call(
        mlp_kernel,
        out_shape=jax.ShapeDtypeStruct((padded_batch, OUTPUT_SIZE), jnp.float32),
        grid=grid,
        in_specs=[
            pl.BlockSpec((tb, INPUT_SIZE), lambda i: (i, 0)),          # x tile (f32)
            pl.BlockSpec((INPUT_SIZE, HIDDEN_1), lambda i: (0, 0)),     # w1 resident
            pl.BlockSpec((HIDDEN_1, HIDDEN_2), lambda i: (0, 0)),       # w2 resident
            pl.BlockSpec((HIDDEN_2, OUTPUT_SIZE), lambda i: (0, 0)),    # w3 resident
            pl.BlockSpec((BIAS_ROWS, BIAS_COLS), lambda i: (0, 0)),     # biases resident
        ],
        out_specs=pl.BlockSpec((tb, OUTPUT_SIZE), lambda i: (i, 0)),
        compiler_params=pltpu.CompilerParams(
            dimension_semantics=("parallel",)),
    )(x, w1_bf, w2_bf, w3_bf, b_pack)

    return out_padded[:batch]


def kaiming_uniform(key, fan_in, fan_out):
    # Matches nn.init.kaiming_uniform_(nonlinearity='relu'):
    #   bound = sqrt(2) * sqrt(3 / fan_in)
    bound = jnp.sqrt(2.0) * jnp.sqrt(3.0 / fan_in)
    # Stored as [in, out] (transposed relative to PyTorch's [out, in]).
    return jax.random.uniform(key, (fan_in, fan_out), jnp.float32, -bound, bound)


def init_params(key):
    k1, k2, k3, kb1, kb2, kb3 = jax.random.split(key, 6)
    w1 = kaiming_uniform(k1, INPUT_SIZE, HIDDEN_1)
    w2 = kaiming_uniform(k2, HIDDEN_1, HIDDEN_2)
    w3 = kaiming_uniform(k3, HIDDEN_2, OUTPUT_SIZE)
    # PyTorch Linear bias default init: U(-1/sqrt(fan_in), 1/sqrt(fan_in)).
    b1 = jax.random.uniform(kb1, (1, HIDDEN_1), jnp.float32,
                            -1.0 / jnp.sqrt(INPUT_SIZE), 1.0 / jnp.sqrt(INPUT_SIZE))
    b2 = jax.random.uniform(kb2, (1, HIDDEN_2), jnp.float32,
                            -1.0 / jnp.sqrt(HIDDEN_1), 1.0 / jnp.sqrt(HIDDEN_1))
    b3 = jax.random.uniform(kb3, (1, OUTPUT_SIZE), jnp.float32,
                            -1.0 / jnp.sqrt(HIDDEN_2), 1.0 / jnp.sqrt(HIDDEN_2))
    return (w1, b1, w2, b2, w3, b3)


def reference_forward(x, params):
    w1, b1, w2, b2, w3, b3 = params
    h = jax.nn.relu(x @ w1 + b1)
    h = jax.nn.relu(h @ w2 + b2)
    return jax.nn.sigmoid(h @ w3 + b3)


if __name__ == "__main__":
    key = jax.random.PRNGKey(0)
    kx, kx2, kp = jax.random.split(key, 3)
    params = init_params(kp)

    # Case 1: batch multiple of 8 (single grid step, no padding).
    batch = 8
    x = jax.random.normal(kx, (batch, INPUT_SIZE), jnp.float32)
    out = jax.block_until_ready(mlp_forward(x, params))
    ref = reference_forward(x, params)
    assert out.shape == (batch, OUTPUT_SIZE)
    # Loosened tolerance: kernel uses bf16 matmuls (f32 accumulate);
    # reference is full f32.
    assert jnp.allclose(out, ref, atol=3e-2, rtol=3e-2), (
        float(jnp.max(jnp.abs(out - ref))))

    # Case 2: ragged batch (exercises the pad-to-multiple-of-8 path).
    batch2 = 19
    x2 = jax.random.normal(kx2, (batch2, INPUT_SIZE), jnp.float32)
    out2 = jax.block_until_ready(mlp_forward(x2, params))
    ref2 = reference_forward(x2, params)
    assert out2.shape == (batch2, OUTPUT_SIZE)
    assert jnp.allclose(out2, ref2, atol=3e-2, rtol=3e-2), (
        float(jnp.max(jnp.abs(out2 - ref2))))

    print("KERNEL_OK")
</pallas_src>

<mosaic_0001>
module attributes {stable_mosaic.version = 11 : i64} {
  func.func @mlp_kernel(%arg0: i32, %arg1: memref<8x22xf32, #tpu.memory_space<vmem>>, %arg2: memref<22x40xbf16, #tpu.memory_space<vmem>>, %arg3: memref<40x18xbf16, #tpu.memory_space<vmem>>, %arg4: memref<18x6xbf16, #tpu.memory_space<vmem>>, %arg5: memref<8x128xf32, #tpu.memory_space<vmem>>, %arg6: memref<8x6xf32, #tpu.memory_space<vmem>>) attributes {dimension_semantics = [#tpu.dimension_semantics<parallel>], iteration_bounds = array<i64: 1>, scalar_prefetch = 0 : i64, scratch_operands = 0 : i64, tpu.core_type = #tpu.core_type<tc>, window_params = [{transform_indices = @transform_0, window_bounds = array<i64: 8, 22>}, {pipeline_mode = #tpu.pipeline_mode<synchronous>, transform_indices = @transform_1, window_bounds = array<i64: 22, 40>}, {pipeline_mode = #tpu.pipeline_mode<synchronous>, transform_indices = @transform_2, window_bounds = array<i64: 40, 18>}, {pipeline_mode = #tpu.pipeline_mode<synchronous>, transform_indices = @transform_3, window_bounds = array<i64: 18, 6>}, {pipeline_mode = #tpu.pipeline_mode<synchronous>, transform_indices = @transform_4, window_bounds = array<i64: 8, 128>}, {transform_indices = @transform_5, window_bounds = array<i64: 8, 6>}]} {
    %c0 = arith.constant 0 : index
    %c0_0 = arith.constant 0 : index
    %0 = vector.load %arg1[%c0, %c0_0] : memref<8x22xf32, #tpu.memory_space<vmem>>, vector<8x22xf32>
    %1 = arith.truncf %0 : vector<8x22xf32> to vector<8x22xbf16>
    %c0_1 = arith.constant 0 : index
    %c0_2 = arith.constant 0 : index
    %2 = vector.load %arg2[%c0_1, %c0_2] : memref<22x40xbf16, #tpu.memory_space<vmem>>, vector<22x40xbf16>
    %cst = arith.constant dense<0.000000e+00> : vector<8x40xf32>
    %3 = tpu.matmul %1, %2, %cst {dimension_numbers = #tpu.dot_dimension_numbers<[1], [0], [0], [1], [0, 0, 1, 1], [], []>} : vector<8x22xbf16>, vector<22x40xbf16>, vector<8x40xf32> -> vector<8x40xf32>
    %c0_3 = arith.constant 0 : index
    %c0_4 = arith.constant 0 : index
    %4 = vector.load %arg5[%c0_3, %c0_4] : memref<8x128xf32, #tpu.memory_space<vmem>>, vector<1x40xf32>
    %5 = vector.broadcast %4 : vector<1x40xf32> to vector<8x40xf32>
    %6 = arith.addf %3, %5 : vector<8x40xf32>
    %cst_5 = arith.constant 0.000000e+00 : f32
    %7 = vector.broadcast %cst_5 : f32 to vector<8x40xf32>
    %8 = arith.maximumf %6, %7 : vector<8x40xf32>
    %9 = arith.truncf %8 : vector<8x40xf32> to vector<8x40xbf16>
    %c0_6 = arith.constant 0 : index
    %c0_7 = arith.constant 0 : index
    %10 = vector.load %arg3[%c0_6, %c0_7] : memref<40x18xbf16, #tpu.memory_space<vmem>>, vector<40x18xbf16>
    %cst_8 = arith.constant dense<0.000000e+00> : vector<8x18xf32>
    %11 = tpu.matmul %9, %10, %cst_8 {dimension_numbers = #tpu.dot_dimension_numbers<[1], [0], [0], [1], [0, 0, 1, 1], [], []>} : vector<8x40xbf16>, vector<40x18xbf16>, vector<8x18xf32> -> vector<8x18xf32>
    %c1 = arith.constant 1 : index
    %c0_9 = arith.constant 0 : index
    %12 = vector.load %arg5[%c1, %c0_9] : memref<8x128xf32, #tpu.memory_space<vmem>>, vector<1x18xf32>
    %13 = vector.broadcast %12 : vector<1x18xf32> to vector<8x18xf32>
    %14 = arith.addf %11, %13 : vector<8x18xf32>
    %cst_10 = arith.constant 0.000000e+00 : f32
    %15 = vector.broadcast %cst_10 : f32 to vector<8x18xf32>
    %16 = arith.maximumf %14, %15 : vector<8x18xf32>
    %17 = arith.truncf %16 : vector<8x18xf32> to vector<8x18xbf16>
    %c0_11 = arith.constant 0 : index
    %c0_12 = arith.constant 0 : index
    %18 = vector.load %arg4[%c0_11, %c0_12] : memref<18x6xbf16, #tpu.memory_space<vmem>>, vector<18x6xbf16>
    %cst_13 = arith.constant dense<0.000000e+00> : vector<8x6xf32>
    %19 = tpu.matmul %17, %18, %cst_13 {dimension_numbers = #tpu.dot_dimension_numbers<[1], [0], [0], [1], [0, 0, 1, 1], [], []>} : vector<8x18xbf16>, vector<18x6xbf16>, vector<8x6xf32> -> vector<8x6xf32>
    %c2 = arith.constant 2 : index
    %c0_14 = arith.constant 0 : index
    %20 = vector.load %arg5[%c2, %c0_14] : memref<8x128xf32, #tpu.memory_space<vmem>>, vector<1x6xf32>
    %21 = vector.broadcast %20 : vector<1x6xf32> to vector<8x6xf32>
    %22 = arith.addf %19, %21 : vector<8x6xf32>
    %cst_15 = arith.constant 5.000000e-01 : f32
    %23 = vector.broadcast %cst_15 : f32 to vector<8x6xf32>
    %24 = arith.mulf %23, %22 : vector<8x6xf32>
    %25 = math.tanh %24 : vector<8x6xf32>
    %cst_16 = arith.constant 1.000000e+00 : f32
    %26 = vector.broadcast %cst_16 : f32 to vector<8x6xf32>
    %27 = arith.addf %25, %26 : vector<8x6xf32>
    %cst_17 = arith.constant 5.000000e-01 : f32
    %28 = vector.broadcast %cst_17 : f32 to vector<8x6xf32>
    %29 = arith.mulf %28, %27 : vector<8x6xf32>
    %c0_18 = arith.constant 0 : index
    %c0_19 = arith.constant 0 : index
    %30 = vector.load %arg6[%c0_18, %c0_19] : memref<8x6xf32, #tpu.memory_space<vmem>>, vector<8x6xf32>
    tpu.vector_store %arg6[%c0_18, %c0_19], %29 {strides = array<i32>} : memref<8x6xf32, #tpu.memory_space<vmem>>, vector<8x6xf32>,
    return
  }
  func.func @transform_0(%arg0: i32) -> (i32, i32) {
    %c0_i32 = arith.constant 0 : i32
    %c0_i32_0 = arith.constant 0 : i32
    return %arg0, %c0_i32 : i32, i32
  }
  func.func @transform_1(%arg0: i32) -> (i32, i32) {
    %c0_i32 = arith.constant 0 : i32
    %c0_i32_0 = arith.constant 0 : i32
    %c0_i32_1 = arith.constant 0 : i32
    return %c0_i32, %c0_i32_0 : i32, i32
  }
  func.func @transform_2(%arg0: i32) -> (i32, i32) {
    %c0_i32 = arith.constant 0 : i32
    %c0_i32_0 = arith.constant 0 : i32
    %c0_i32_1 = arith.constant 0 : i32
    return %c0_i32, %c0_i32_0 : i32, i32
  }
  func.func @transform_3(%arg0: i32) -> (i32, i32) {
    %c0_i32 = arith.constant 0 : i32
    %c0_i32_0 = arith.constant 0 : i32
    %c0_i32_1 = arith.constant 0 : i32
    return %c0_i32, %c0_i32_0 : i32, i32
  }
  func.func @transform_4(%arg0: i32) -> (i32, i32) {
    %c0_i32 = arith.constant 0 : i32
    %c0_i32_0 = arith.constant 0 : i32
    %c0_i32_1 = arith.constant 0 : i32
    return %c0_i32, %c0_i32_0 : i32, i32
  }
  func.func @transform_5(%arg0: i32) -> (i32, i32) {
    %c0_i32 = arith.constant 0 : i32
    %c0_i32_0 = arith.constant 0 : i32
    return %arg0, %c0_i32 : i32, i32
  }
}

</mosaic_0001>

<llo_original>
// kernel: tpu_custom_call.1
$region0: #{tpu_custom_call.1}
  #allocation0 [shape = 'u32[]', space=smem, size = 0x4, offset = 0x4, fixed_abs, tag = 'smem constant byte address 0x4 - core index']
  #allocation1 [shape = 'u32[144,128]{1,0:T(1,128)}', space=vmem, size = 0x12000, scoped, tag = 'internal scratch']
  %s0 = inlined_call_operand.vmem [shape: f32[8,22], index: 0, kind: input, shape index: {}]
  %s1 = inlined_call_operand.vmem [shape: bf16[22,40], index: 1, kind: input, shape index: {}]
  %s2 = inlined_call_operand.vmem [shape: bf16[40,18], index: 2, kind: input, shape index: {}]
  %s3 = inlined_call_operand.vmem [shape: bf16[18,6], index: 3, kind: input, shape index: {}]
  %s4 = inlined_call_operand.vmem [shape: f32[8,128], index: 4, kind: input, shape index: {}]
  %s5 = inlined_call_operand.hbm [shape: f32[8,6], index: 5, kind: output, shape index: {}]
  %s6 = sld [smem:[#allocation0]]
  $region30: #{tpu_custom_call.1} parent=0
    _
  %s8 = ssub.s32 1, %s6
  %s9 = scalar_select 0, %s8, %s6
  $region1: #{tpu_custom_call.1} parent=0
    #allocation2 [shape = 'u8[4096]{0}', space=vmem, size = 0x1000, scoped, tag = 'output window, operand 0, single buffered']
    #allocation3 [shape = 's32[1]{0}', space=sflag, size = 0x4, scoped, tag = 'scoped memory for tpu_custom_call.1']
    %10 = vsyncpa [#allocation3], 0
    // Predicated region
    $region2: #{tpu_custom_call.1} parent=1 // pred_check
      _
    $region3: #{tpu_custom_call.1} parent=1 // pred_check_branch
      %12 = sbr.rel (0) target = $region5
    $region4: #{tpu_custom_call.1} parent=1 // pred_region
      _
    $region5: #{tpu_custom_call.1} parent=1 // pred_fallthru
      _
    // Predicated region
    $region6: #{tpu_custom_call.1} parent=1 // pred_check
      _
    $region7: #{tpu_custom_call.1} parent=1 // pred_check_branch
      %14 = sbr.rel (0) target = $region9
    $region8: #{tpu_custom_call.1} parent=1 // pred_region
      _
    $region9: #{tpu_custom_call.1} parent=1 // pred_fallthru
      _
    // Predicated region
    $region10: #{tpu_custom_call.1} parent=1 // pred_check
      _
    $region11: #{tpu_custom_call.1} parent=1 // pred_check_branch
      %16 = sbr.rel (0) target = $region13
    $region12: #{tpu_custom_call.1} parent=1 // pred_region
      _
    $region13: #{tpu_custom_call.1} parent=1 // pred_fallthru
      _
    // Predicated region
    $region14: #{tpu_custom_call.1} parent=1 // pred_check
      _
    $region15: #{tpu_custom_call.1} parent=1 // pred_check_branch
      %18 = sbr.rel (0) target = $region17
    $region16: #{tpu_custom_call.1} parent=1 // pred_region
      _
    $region17: #{tpu_custom_call.1} parent=1 // pred_fallthru
      _
    // Predicated region
    $region18: #{tpu_custom_call.1} parent=1 // pred_check
      _
    $region19: #{tpu_custom_call.1} parent=1 // pred_check_branch
      %20 = sbr.rel (0) target = $region21
    $region20: #{tpu_custom_call.1} parent=1 // pred_region
      _
    $region21: #{tpu_custom_call.1} parent=1 // pred_fallthru
      _
    %v22 = vld [vmem:[%s0] sm:$0xff]
    %v23 = vpack.c.bf16 %v22, %v22
    %v24 = vld [vmem:[%s1] sm:$0xf]
    %v25 = vld [vmem:[%s1 + $0x4] sm:$0xf]
    %v26 = vld [vmem:[%s1 + $0x8] sm:$0x7]
    %v27 = vld [vmem:[%s4] sm:$0x1]
    %v28 = vlaneseq
    %v29 = vshrl.u32 %v28, 7
    %v30 = vsub.s32 0, %v29
    %v31 = vrot.slane %v27, %v30
    %v35 = vunpack.c.l.b16 %v24
    %v36 = vunpack.c.l.b16 %v25
    %v37 = vunpack.c.l.b16 %v26
    %v38 = vpack.c.b16 %v36, %v35
    %v39 = vpack.c.b16 %v37, %v37
    %vm41 = vcmask 179200
    %v43 = vsel %vm41, %v23, 0
    %vm45 = vcmask 1042432
    %v47 = vsel %vm45, %v39, 0
    %49 = vmatprep.subr.bf16.mxu0 0
    %50 = vmatpush1.bf16.msra.mxu0 %v38
    %51 = vmatprep.subr.bf16.mxu0 0
    %52 = vmatpush1.bf16.msra.mxu0 %v47
    %53 = vmatprep.subr.bf16.mxu0 0
    %54 = vmatpush1.bf16.msra.mxu0 0
    %55 = vmatprep.subr.bf16.mxu0 0
    %56 = vmatpush1.bf16.msra.mxu0 0
    %57 = vmatprep.subr.bf16.mxu0 0
    %58 = vmatpush1.bf16.msra.mxu0 0
    %59 = vmatprep.subr.bf16.mxu0 0
    %60 = vmatpush1.bf16.msra.mxu0 0
    %61 = vmatprep.subr.bf16.mxu0 0
    %62 = vmatpush1.bf16.msra.mxu0 0
    %63 = vmatprep.subr.bf16.mxu0 0
    %64 = vmatpush1.bf16.msra.mxu0 0
    %65 = vmatprep.subr.bf16.mxu0 0
    %66 = vmatpush1.bf16.msra.mxu0 0
    %67 = vmatprep.subr.bf16.mxu0 0
    %68 = vmatpush1.bf16.msra.mxu0 0
    %69 = vmatprep.subr.bf16.mxu0 0
    %70 = vmatpush1.bf16.msra.mxu0 0
    %71 = vmatprep.subr.bf16.mxu0 0
    %72 = vmatpush1.bf16.msra.mxu0 0
    %73 = vmatprep.subr.bf16.mxu0 0
    %74 = vmatpush1.bf16.msra.mxu0 0
    %75 = vmatprep.subr.bf16.mxu0 0
    %76 = vmatpush1.bf16.msra.mxu0 0
    %77 = vmatprep.subr.bf16.mxu0 0
    %78 = vmatpush1.bf16.msra.mxu0 0
    %79 = vmatprep.subr.bf16.mxu0 0
    %80 = vmatpush1.bf16.msra.mxu0 0
    %81 = vmatprep.mubr.bf16.mxu0 0
    %82 = vmatmul.mubr.bf16.gmra.mrb[0].mxu0 %v43
    %v83 = vpop.f32.mrb[0].mxu0
    %v84 = vadd.f32 %v31, %v83
    %v85 = vpop.f32.mrb[0].mxu0
    %v86 = vpop.f32.mrb[0].mxu0
    %v87 = vpop.f32.mrb[0].mxu0
    %88 = vdwg.mxu0
    %v89 = vmax.f32 %v84, 0.0
    %v90 = vpack.c.bf16 %v89, %v89
    %v91 = vld [vmem:[%s2] sm:$0xf]
    %v92 = vld [vmem:[%s2 + $0x4] sm:$0xf]
    %v93 = vld [vmem:[%s2 + $0x8] sm:$0xf]
    %v94 = vld [vmem:[%s2 + $0xc] sm:$0xf]
    %v95 = vld [vmem:[%s2 + $0x10] sm:$0xf]
    %v96 = vld [vmem:[%s4 + $0x1] sm:$0x1]
    %v97 = vlaneseq
    %v98 = vshrl.u32 %v97, 7
    %v99 = vsub.s32 0, %v98
    %v100 = vrot.slane %v96, %v99
    %v106 = vunpack.c.l.b16 %v91
    %v107 = vunpack.c.l.b16 %v92
    %v108 = vunpack.c.l.b16 %v93
    %v109 = vunpack.c.l.b16 %v94
    %v110 = vunpack.c.l.b16 %v95
    %v111 = vpack.c.b16 %v107, %v106
    %v112 = vpack.c.b16 %v109, %v108
    %v113 = vpack.c.b16 %v110, %v110
    %vm116 = vcmask 326656
    %v118 = vsel %vm116, %v90, 0
    %vm120 = vcmask 1043456
    %v122 = vsel %vm120, %v113, 0
    %124 = vmatprep.subr.bf16.mxu0 0
    %125 = vmatpush1.bf16.msra.mxu0 %v111
    %126 = vmatprep.subr.bf16.mxu0 0
    %127 = vmatpush1.bf16.msra.mxu0 %v112
    %128 = vmatprep.subr.bf16.mxu0 0
    %129 = vmatpush1.bf16.msra.mxu0 %v122
    %130 = vmatprep.subr.bf16.mxu0 0
    %131 = vmatpush1.bf16.msra.mxu0 0
    %132 = vmatprep.subr.bf16.mxu0 0
    %133 = vmatpush1.bf16.msra.mxu0 0
    %134 = vmatprep.subr.bf16.mxu0 0
    %135 = vmatpush1.bf16.msra.mxu0 0
    %136 = vmatprep.subr.bf16.mxu0 0
    %137 = vmatpush1.bf16.msra.mxu0 0
    %138 = vmatprep.subr.bf16.mxu0 0
    %139 = vmatpush1.bf16.msra.mxu0 0
    %140 = vmatprep.subr.bf16.mxu0 0
    %141 = vmatpush1.bf16.msra.mxu0 0
    %142 = vmatprep.subr.bf16.mxu0 0
    %143 = vmatpush1.bf16.msra.mxu0 0
    %144 = vmatprep.subr.bf16.mxu0 0
    %145 = vmatpush1.bf16.msra.mxu0 0
    %146 = vmatprep.subr.bf16.mxu0 0
    %147 = vmatpush1.bf16.msra.mxu0 0
    %148 = vmatprep.subr.bf16.mxu0 0
    %149 = vmatpush1.bf16.msra.mxu0 0
    %150 = vmatprep.subr.bf16.mxu0 0
    %151 = vmatpush1.bf16.msra.mxu0 0
    %152 = vmatprep.subr.bf16.mxu0 0
    %153 = vmatpush1.bf16.msra.mxu0 0
    %154 = vmatprep.subr.bf16.mxu0 0
    %155 = vmatpush1.bf16.msra.mxu0 0
    %156 = vmatprep.mubr.bf16.mxu0 0
    %157 = vmatmul.mubr.bf16.gmra.mrb[0].mxu0 %v118
    %v158 = vpop.f32.mrb[0].mxu0
    %v159 = vadd.f32 %v100, %v158
    %v160 = vpop.f32.mrb[0].mxu0
    %v161 = vpop.f32.mrb[0].mxu0
    %v162 = vpop.f32.mrb[0].mxu0
    %163 = vdwg.mxu0
    %v164 = vmax.f32 %v159, 0.0
    %v165 = vpack.c.bf16 %v164, %v164
    %v166 = vld [vmem:[%s3] sm:$0xf]
    %v167 = vld [vmem:[%s3 + $0x4] sm:$0xf]
    %v168 = vld [vmem:[%s3 + $0x8] sm:$0x1]
    %v169 = vld [vmem:[%s4 + $0x2] sm:$0x1]
    %v170 = vlaneseq
    %v171 = vshrl.u32 %v170, 7
    %v172 = vsub.s32 0, %v171
    %v173 = vrot.slane %v169, %v172
    %v177 = vunpack.c.l.b16 %v166
    %v178 = vunpack.c.l.b16 %v167
    %v179 = vunpack.c.l.b16 %v168
    %v180 = vpack.c.b16 %v178, %v177
    %v181 = vpack.c.b16 %v179, %v179
    %vm183 = vcmask 146432
    %v185 = vsel %vm183, %v165, 0
    %vm187 = vcmask 1040384
    %v189 = vsel %vm187, %v181, 0
    %191 = vmatprep.subr.bf16.mxu0 0
    %192 = vmatpush1.bf16.msra.mxu0 %v180
    %193 = vmatprep.subr.bf16.mxu0 0
    %194 = vmatpush1.bf16.msra.mxu0 %v189
    %195 = vmatprep.subr.bf16.mxu0 0
    %196 = vmatpush1.bf16.msra.mxu0 0
    %197 = vmatprep.subr.bf16.mxu0 0
    %198 = vmatpush1.bf16.msra.mxu0 0
    %199 = vmatprep.subr.bf16.mxu0 0
    %200 = vmatpush1.bf16.msra.mxu0 0
    %201 = vmatprep.subr.bf16.mxu0 0
    %202 = vmatpush1.bf16.msra.mxu0 0
    %203 = vmatprep.subr.bf16.mxu0 0
    %204 = vmatpush1.bf16.msra.mxu0 0
    %205 = vmatprep.subr.bf16.mxu0 0
    %206 = vmatpush1.bf16.msra.mxu0 0
    %207 = vmatprep.subr.bf16.mxu0 0
    %208 = vmatpush1.bf16.msra.mxu0 0
    %209 = vmatprep.subr.bf16.mxu0 0
    %210 = vmatpush1.bf16.msra.mxu0 0
    %211 = vmatprep.subr.bf16.mxu0 0
    %212 = vmatpush1.bf16.msra.mxu0 0
    %213 = vmatprep.subr.bf16.mxu0 0
    %214 = vmatpush1.bf16.msra.mxu0 0
    %215 = vmatprep.subr.bf16.mxu0 0
    %216 = vmatpush1.bf16.msra.mxu0 0
    %217 = vmatprep.subr.bf16.mxu0 0
    %218 = vmatpush1.bf16.msra.mxu0 0
    %219 = vmatprep.subr.bf16.mxu0 0
    %220 = vmatpush1.bf16.msra.mxu0 0
    %221 = vmatprep.subr.bf16.mxu0 0
    %222 = vmatpush1.bf16.msra.mxu0 0
    %223 = vmatprep.mubr.bf16.mxu0 0
    %224 = vmatmul.mubr.bf16.gmra.mrb[0].mxu0 %v185
    %v225 = vpop.f32.mrb[0].mxu0
    %v226 = vadd.f32 %v173, %v225
    %v227 = vpop.f32.mrb[0].mxu0
    %v228 = vpop.f32.mrb[0].mxu0
    %v229 = vpop.f32.mrb[0].mxu0
    %230 = vdwg.mxu0
    %v231 = vmul.f32 %v226, 0.5
    %v232 = vtanh.pop %v231
    %v233 = vadd.f32 %v232, 1.0
    %v234 = vmul.f32 %v233, 0.5
    %vm235 = vcmask 48128
    %236 = vst.msk [vmem:[#allocation2] sm:$0xff] %vm235, %v234
    // Predicated region
    $region22: #{tpu_custom_call.1} parent=1 // pred_check
      _
    $region23: #{tpu_custom_call.1} parent=1 // pred_check_branch
      %238 = sbr.rel (0) target = $region25
    $region24: #{tpu_custom_call.1} parent=1 // pred_region
      %s240 = ssub.s32 128, 128
      %241 = vsyncadd [#allocation3], %s240
      %s243 = sshll.u32 [#allocation2], 4
      %s244 = int_to_ptr.vmem [resolvable:$true] %s243
      %246 = dma.vmem_to_hbm [thread:$0]  %s244, 128, %s5, [#allocation3]
    $region25: #{tpu_custom_call.1} parent=1 // pred_fallthru
      _
    // Predicated region
    $region26: #{tpu_custom_call.1} parent=1 // pred_check
      _
    $region27: #{tpu_custom_call.1} parent=1 // pred_check_branch
      %248 = sbr.rel (0) target = $region29
    $region28: #{tpu_custom_call.1} parent=1 // pred_region
      %249 = dma.done [#allocation3], 128
    $region29: #{tpu_custom_call.1} parent=1 // pred_fallthru
      _
    %250 = vsyncpa [#allocation3], 1

</llo_original>
